<compile_context>
chip_gen: v7x
topology: tpu7x:2x2x1
jax: 0.10.0
libtpu: 0.0.40
codegen_flags: <defaults>
</compile_context>

<pallas_src>
import jax
import jax.numpy as jnp
from jax.experimental import pallas as pl
from jax.experimental.pallas import tpu as pltpu

IN_FEATURES = 1024
OUT_FEATURES = 1


def _round_up(x, m):
    return (x + m - 1) // m * m


def _default_tb_max():
    # 2048 rows (16 MiB double-buffered f32 state) is safe on every chip;
    # chips with 128 MiB physical VMEM (v5e/v6e) get 4096 to halve step count.
    try:
        vmem = pltpu.get_tpu_info().vmem_capacity_bytes
    except Exception:
        vmem = 64 << 20
    return 4096 if vmem >= (96 << 20) else 2048


def dqn_fc_kernel(b_ref, x_ref, w_ref, o_ref):
    # b_ref: (1,) in SMEM (scalar prefetch)
    # x_ref: (TB, 1024) VMEM state tile
    # w_ref: (1, 1024) VMEM lane-dense weight row (PyTorch (out, in) layout)
    # o_ref: (1, 1, TB) VMEM lane-dense output slab
    # MXU matvec contracting the 1024 axis of both operands ("NT" matmul):
    # result comes out lane-dense as (1, TB); no (TB, 1024) intermediate.
    acc = jax.lax.dot_general(
        w_ref[...], x_ref[...],
        dimension_numbers=(((1,), (1,)), ((), ())),
        preferred_element_type=jnp.float32,
    )                                                    # (1, TB) f32
    o_ref[0] = (acc + b_ref[0]).astype(o_ref.dtype)


def dqn_forward(state, weight, bias, *, tb_max=None):
    """state: (B, 1024); weight: (1, 1024) (PyTorch layout); bias: (1,)."""
    B = state.shape[0]
    assert state.shape[1] == IN_FEATURES
    if tb_max is None:
        tb_max = _default_tb_max()

    # Match weight dtype to the streamed state dtype (enables bf16 streaming).
    if weight.dtype != state.dtype:
        weight = weight.astype(state.dtype)

    # Tile: multiple of 8, capped by tb_max, and small enough that the grid
    # has at least 2 steps once B is big enough (v7x has 2 TCs to feed).
    TB = min(tb_max, max(8, _round_up(pl.cdiv(B, 2), 8)))
    num_tiles = pl.cdiv(B, TB)

    itemsize = jnp.dtype(state.dtype).itemsize
    vmem_bytes = (
        2 * TB * IN_FEATURES * itemsize   # double-buffered state tile
        + 2 * IN_FEATURES * itemsize      # weight (resident, double-buffered)
        + 2 * TB * itemsize               # lane-dense output slab
    )
    vmem_limit = min(max(vmem_bytes + (2 << 20), 4 << 20), 48 << 20)

    cost = pl.CostEstimate(
        flops=2 * B * IN_FEATURES,
        transcendentals=0,
        bytes_accessed=(B * IN_FEATURES * itemsize
                        + IN_FEATURES * itemsize + 4 + B * itemsize),
    )

    out = pl.pallas_call(
        dqn_fc_kernel,
        out_shape=jax.ShapeDtypeStruct((num_tiles, 1, TB), state.dtype),
        grid_spec=pltpu.PrefetchScalarGridSpec(
            num_scalar_prefetch=1,  # bias -> SMEM
            grid=(num_tiles,),
            in_specs=[
                pl.BlockSpec((TB, IN_FEATURES), lambda i, b: (i, 0)),
                pl.BlockSpec((1, IN_FEATURES), lambda i, b: (0, 0)),
            ],
            out_specs=pl.BlockSpec((1, 1, TB), lambda i, b: (i, 0, 0)),
        ),
        compiler_params=pltpu.CompilerParams(
            dimension_semantics=("parallel",),
            vmem_limit_bytes=vmem_limit,
        ),
        cost_estimate=cost,
    )(bias, state, weight)

    # Lane-dense (num_tiles, 1, TB) -> (B, 1); drop padded tail rows.
    return out.reshape(num_tiles * TB)[:B].reshape(B, OUT_FEATURES)


def init_params(key):
    # Mimic nn.Linear default init: U(-1/sqrt(fan_in), 1/sqrt(fan_in)).
    kw, kb = jax.random.split(key)
    bound = 1.0 / jnp.sqrt(jnp.float32(IN_FEATURES))
    weight = jax.random.uniform(
        kw, (OUT_FEATURES, IN_FEATURES), jnp.float32, -bound, bound
    )
    bias = jax.random.uniform(kb, (OUT_FEATURES,), jnp.float32, -bound, bound)
    return weight, bias


if __name__ == "__main__":
    key = jax.random.PRNGKey(0)
    k_params, k_state = jax.random.split(key)

    weight, bias = init_params(k_params)

    B = 8  # small demo batch (production should batch many states per call)
    state = jax.random.normal(k_state, (B, IN_FEATURES), jnp.float32)

    qvals = dqn_forward(state, weight, bias)
    qvals = jax.block_until_ready(qvals)

    # Exact-f32 elementwise reference (same math as torch F.linear).
    ref = (state * weight).sum(axis=-1, keepdims=True) + bias[None, :]
    assert qvals.shape == (B, OUT_FEATURES)
    # Tolerance leaves headroom for MXU f32-matmul pass rounding.
    assert jnp.allclose(qvals, ref, atol=1e-2, rtol=1e-2), float(
        jnp.max(jnp.abs(qvals - ref))
    )

    print("KERNEL_OK")
</pallas_src>

<mosaic_0001>
module attributes {stable_mosaic.version = 11 : i64} {
  func.func @dqn_fc_kernel(%arg0: i32, %arg1: memref<1xf32, #tpu.memory_space<smem>>, %arg2: memref<8x1024xf32, #tpu.memory_space<vmem>>, %arg3: memref<1x1024xf32, #tpu.memory_space<vmem>>, %arg4: memref<1x1x8xf32, #tpu.memory_space<vmem>>) attributes {dimension_semantics = [#tpu.dimension_semantics<parallel>], iteration_bounds = array<i64: 1>, scalar_prefetch = 1 : i64, scratch_operands = 0 : i64, tpu.core_type = #tpu.core_type<tc>, window_params = [{transform_indices = @transform_0, window_bounds = array<i64: 8, 1024>}, {pipeline_mode = #tpu.pipeline_mode<synchronous>, transform_indices = @transform_1, window_bounds = array<i64: 1, 1024>}, {transform_indices = @transform_2, window_bounds = array<i64: 1, 1, 8>}]} {
    %c0 = arith.constant 0 : index
    %c0_0 = arith.constant 0 : index
    %0 = vector.load %arg3[%c0, %c0_0] : memref<1x1024xf32, #tpu.memory_space<vmem>>, vector<1x1024xf32>
    %c0_1 = arith.constant 0 : index
    %c0_2 = arith.constant 0 : index
    %1 = vector.load %arg2[%c0_1, %c0_2] : memref<8x1024xf32, #tpu.memory_space<vmem>>, vector<8x1024xf32>
    %cst = arith.constant dense<0.000000e+00> : vector<1x8xf32>
    %2 = tpu.matmul %0, %1, %cst {dimension_numbers = #tpu.dot_dimension_numbers<[1], [1], [0], [0], [0, 0, 1, 0], [], []>} : vector<1x1024xf32>, vector<8x1024xf32>, vector<1x8xf32> -> vector<1x8xf32>
    %c0_3 = arith.constant 0 : index
    %3 = memref.load %arg1[%c0_3] : memref<1xf32, #tpu.memory_space<smem>>
    %4 = vector.broadcast %3 : f32 to vector<1x8xf32>
    %5 = arith.addf %2, %4 : vector<1x8xf32>
    %c0_4 = arith.constant 0 : index
    %c0_5 = arith.constant 0 : index
    %c0_6 = arith.constant 0 : index
    %6 = vector.load %arg4[%c0_4, %c0_5, %c0_6] : memref<1x1x8xf32, #tpu.memory_space<vmem>>, vector<1x1x8xf32>
    %7 = vector.shape_cast %6 : vector<1x1x8xf32> to vector<1x8xf32>
    %8 = vector.shape_cast %5 : vector<1x8xf32> to vector<1x1x8xf32>
    tpu.vector_store %arg4[%c0_4, %c0_5, %c0_6], %8 {strides = array<i32>} : memref<1x1x8xf32, #tpu.memory_space<vmem>>, vector<1x1x8xf32>,
    return
  }
  func.func @transform_0(%arg0: i32, %arg1: memref<1xf32, #tpu.memory_space<smem>>) -> (i32, i32) {
    %c0_i32 = arith.constant 0 : i32
    %c0_i32_0 = arith.constant 0 : i32
    return %arg0, %c0_i32 : i32, i32
  }
  func.func @transform_1(%arg0: i32, %arg1: memref<1xf32, #tpu.memory_space<smem>>) -> (i32, i32) {
    %c0_i32 = arith.constant 0 : i32
    %c0_i32_0 = arith.constant 0 : i32
    %c0_i32_1 = arith.constant 0 : i32
    return %c0_i32, %c0_i32_0 : i32, i32
  }
  func.func @transform_2(%arg0: i32, %arg1: memref<1xf32, #tpu.memory_space<smem>>) -> (i32, i32, i32) {
    %c0_i32 = arith.constant 0 : i32
    %c0_i32_0 = arith.constant 0 : i32
    %c0_i32_1 = arith.constant 0 : i32
    return %arg0, %c0_i32, %c0_i32_0 : i32, i32, i32
  }
}

</mosaic_0001>

<llo_original>
// kernel: tpu_custom_call.1
$region0: #{tpu_custom_call.1}
  #allocation0 [shape = 'u32[]', space=smem, size = 0x4, offset = 0x4, fixed_abs, tag = 'smem constant byte address 0x4 - core index']
  #allocation1 [shape = 'u32[144,128]{1,0:T(1,128)}', space=vmem, size = 0x12000, scoped, tag = 'internal scratch']
  #allocation2 [shape = 's32[1]{0}', space=sflag, size = 0x4, scoped, tag = 'scoped memory for tpu_custom_call.1']
  #allocation3 [shape = 'f32[1]{0:T(128)S(6)}', space=smem, size = 0x200, scoped, tag = 'prefetched SMEM operand 0']
  %s0 = inlined_call_operand.<no memory space> [shape: f32[1], index: 0, kind: input, shape index: {}]
  %s1 = inlined_call_operand.hbm [shape: f32[8,1024], index: 1, kind: input, shape index: {}]
  %s2 = inlined_call_operand.hbm [shape: f32[1,1024], index: 2, kind: input, shape index: {}]
  %s3 = inlined_call_operand.hbm [shape: f32[1,1,8], index: 3, kind: output, shape index: {}]
  %s4 = sld [smem:[#allocation0]]
  $region26: #{tpu_custom_call.1} parent=0
    _
  %s6 = ssub.s32 1, %s4
  %s7 = scalar_select 0, %s6, %s4
  %8 = sst [smem:[#allocation3]] %s0
  $region1: #{tpu_custom_call.1} parent=0
    #allocation4 [shape = 'u8[32768]{0}', space=vmem, size = 0x8000, scoped, tag = 'input window, operand 1, single buffered']
    #allocation5 [shape = 's32[1]{0}', space=sflag, size = 0x4, scoped, tag = 'scoped memory for tpu_custom_call.1']
    #allocation6 [shape = 's32[1]{0}', space=sflag, size = 0x4, scoped, tag = 'scoped memory for tpu_custom_call.1']
    #allocation7 [shape = 'u8[4096]{0}', space=vmem, size = 0x1000, scoped, tag = 'input window, operand 2, single buffered']
    #allocation8 [shape = 's32[1]{0}', space=sflag, size = 0x4, scoped, tag = 'scoped memory for tpu_custom_call.1']
    #allocation9 [shape = 'u8[512]{0}', space=vmem, size = 0x400, scoped, tag = 'output window, operand 0, single buffered']
    %9 = vsyncpa [#allocation5], 0
    %10 = vsyncpa [#allocation8], 0
    %11 = vsyncpa [#allocation6], 0
    // Predicated region
    $region2: #{tpu_custom_call.1} parent=1 // pred_check
      _
    $region3: #{tpu_custom_call.1} parent=1 // pred_check_branch
      %13 = sbr.rel (0) target = $region5
    $region4: #{tpu_custom_call.1} parent=1 // pred_region
      %s15 = ssub.s32 1024, 1024
      %16 = vsyncadd [#allocation5], %s15
      %s18 = sshll.u32 [#allocation4], 4
      %s19 = int_to_ptr.vmem [resolvable:$true] %s18
      %21 = dma.hbm_to_vmem [thread:$0]  %s1, 1024, %s19, [#allocation5]
    $region5: #{tpu_custom_call.1} parent=1 // pred_fallthru
      _
    // Predicated region
    $region6: #{tpu_custom_call.1} parent=1 // pred_check
      _
    $region7: #{tpu_custom_call.1} parent=1 // pred_check_branch
      %23 = sbr.rel (0) target = $region9
    $region8: #{tpu_custom_call.1} parent=1 // pred_region
      %s25 = ssub.s32 128, 128
      %26 = vsyncadd [#allocation8], %s25
      %s28 = sshll.u32 [#allocation7], 4
      %s29 = int_to_ptr.vmem [resolvable:$true] %s28
      %31 = dma.hbm_to_vmem [thread:$0]  %s2, 128, %s29, [#allocation8]
    $region9: #{tpu_custom_call.1} parent=1 // pred_fallthru
      _
    // Predicated region
    $region10: #{tpu_custom_call.1} parent=1 // pred_check
      _
    $region11: #{tpu_custom_call.1} parent=1 // pred_check_branch
      %33 = sbr.rel (0) target = $region13
    $region12: #{tpu_custom_call.1} parent=1 // pred_region
      %34 = dma.done [#allocation5], 1024
    $region13: #{tpu_custom_call.1} parent=1 // pred_fallthru
      _
    // Predicated region
    $region14: #{tpu_custom_call.1} parent=1 // pred_check
      _
    $region15: #{tpu_custom_call.1} parent=1 // pred_check_branch
      %36 = sbr.rel (0) target = $region17
    $region16: #{tpu_custom_call.1} parent=1 // pred_region
      %37 = dma.done [#allocation8], 128
    $region17: #{tpu_custom_call.1} parent=1 // pred_fallthru
      _
    %v38 = vld [vmem:[#allocation7] sm:$0xff]
    %v39 = vld [vmem:[#allocation4] sm:$0xff]
    %v40 = vld [vmem:[#allocation4 + $0x8] sm:$0xff]
    %v41 = vld [vmem:[#allocation4 + $0x10] sm:$0xff]
    %v42 = vld [vmem:[#allocation4 + $0x18] sm:$0xff]
    %v43 = vld [vmem:[#allocation4 + $0x20] sm:$0xff]
    %v44 = vld [vmem:[#allocation4 + $0x28] sm:$0xff]
    %v45 = vld [vmem:[#allocation4 + $0x30] sm:$0xff]
    %v46 = vld [vmem:[#allocation4 + $0x38] sm:$0xff]
    %s47 = sld [smem:[#allocation3]]
    %v48 = vstv %s47
    %v50 = vlaneseq
    %v51 = vshrl.u32 %v50, 7
    %v52 = vsub.s32 0, %v51
    %v53 = vrot.slane %v38, %v52
    %v54 = vlaneseq
    %v55 = vshrl.u32 %v54, 7
    %v56 = vsub.s32 1, %v55
    %v57 = vrot.slane %v38, %v56
    %v58 = vlaneseq
    %v59 = vshrl.u32 %v58, 7
    %v60 = vsub.s32 2, %v59
    %v61 = vrot.slane %v38, %v60
    %v62 = vlaneseq
    %v63 = vshrl.u32 %v62, 7
    %v64 = vsub.s32 3, %v63
    %v65 = vrot.slane %v38, %v64
    %v66 = vlaneseq
    %v67 = vshrl.u32 %v66, 7
    %v68 = vsub.s32 4, %v67
    %v69 = vrot.slane %v38, %v68
    %v70 = vlaneseq
    %v71 = vshrl.u32 %v70, 7
    %v72 = vsub.s32 5, %v71
    %v73 = vrot.slane %v38, %v72
    %v74 = vlaneseq
    %v75 = vshrl.u32 %v74, 7
    %v76 = vsub.s32 6, %v75
    %v77 = vrot.slane %v38, %v76
    %v78 = vlaneseq
    %v79 = vshrl.u32 %v78, 7
    %v80 = vsub.s32 7, %v79
    %v81 = vrot.slane %v38, %v80
    %90 = vmatprep.subr.mxu0 %v40
    %91 = vmatpush1.xpose.msra.mxu0 %v39
    %92 = vmatprep.subr.mxu0 0.0
    %93 = vmatpush1.xpose.msra.mxu0 0.0
    %94 = vmatprep.subr.mxu0 0.0
    %95 = vmatpush1.xpose.msra.mxu0 0.0
    %96 = vmatprep.subr.mxu0 0.0
    %97 = vmatpush1.xpose.msra.mxu0 0.0
    %98 = vmatprep.subr.mxu0 0.0
    %99 = vmatpush1.xpose.msra.mxu0 0.0
    %100 = vmatprep.subr.mxu0 0.0
    %101 = vmatpush1.xpose.msra.mxu0 0.0
    %102 = vmatprep.subr.mxu0 0.0
    %103 = vmatpush1.xpose.msra.mxu0 0.0
    %104 = vmatprep.subr.mxu0 0.0
    %105 = vmatpush1.xpose.msra.mxu0 0.0
    %106 = vmatprep.subr.mxu0 0.0
    %107 = vmatpush1.xpose.msra.mxu0 0.0
    %108 = vmatprep.subr.mxu0 0.0
    %109 = vmatpush1.xpose.msra.mxu0 0.0
    %110 = vmatprep.subr.mxu0 0.0
    %111 = vmatpush1.xpose.msra.mxu0 0.0
    %112 = vmatprep.subr.mxu0 0.0
    %113 = vmatpush1.xpose.msra.mxu0 0.0
    %114 = vmatprep.subr.mxu0 0.0
    %115 = vmatpush1.xpose.msra.mxu0 0.0
    %116 = vmatprep.subr.mxu0 0.0
    %117 = vmatpush1.xpose.msra.mxu0 0.0
    %118 = vmatprep.subr.mxu0 0.0
    %119 = vmatpush1.xpose.msra.mxu0 0.0
    %120 = vmatprep.subr.mxu0 0.0
    %121 = vmatpush1.xpose.msra.mxu0 0.0
    %122 = vmatprep.subr.mxu0 0.0
    %123 = vmatpush1.xpose.msra.mxu0 0.0
    %124 = vmatprep.subr.mxu0 0.0
    %125 = vmatpush1.xpose.msra.mxu0 0.0
    %126 = vmatprep.subr.mxu0 0.0
    %127 = vmatpush1.xpose.msra.mxu0 0.0
    %128 = vmatprep.subr.mxu0 0.0
    %129 = vmatpush1.xpose.msra.mxu0 0.0
    %130 = vmatprep.subr.mxu0 0.0
    %131 = vmatpush1.xpose.msra.mxu0 0.0
    %132 = vmatprep.subr.mxu0 0.0
    %133 = vmatpush1.xpose.msra.mxu0 0.0
    %134 = vmatprep.subr.mxu0 0.0
    %135 = vmatpush1.xpose.msra.mxu0 0.0
    %136 = vmatprep.subr.mxu0 0.0
    %137 = vmatpush1.xpose.msra.mxu0 0.0
    %138 = vmatprep.subr.mxu0 0.0
    %139 = vmatpush1.xpose.msra.mxu0 0.0
    %140 = vmatprep.subr.mxu0 0.0
    %141 = vmatpush1.xpose.msra.mxu0 0.0
    %142 = vmatprep.subr.mxu0 0.0
    %143 = vmatpush1.xpose.msra.mxu0 0.0
    %144 = vmatprep.subr.mxu0 0.0
    %145 = vmatpush1.xpose.msra.mxu0 0.0
    %146 = vmatprep.subr.mxu0 0.0
    %147 = vmatpush1.xpose.msra.mxu0 0.0
    %148 = vmatprep.subr.mxu0 0.0
    %149 = vmatpush1.xpose.msra.mxu0 0.0
    %150 = vmatprep.subr.mxu0 0.0
    %151 = vmatpush1.xpose.msra.mxu0 0.0
    %152 = vmatprep.subr.mxu0 0.0
    %153 = vmatpush1.xpose.msra.mxu0 0.0
    %154 = vmatprep.mubr.f32.mxu0 %v57
    %155 = vmatmul.mubr.f32.gmra.mrb[0].mxu0 %v53
    %v156 = vpop.f32.mrb[0].mxu0
    %v157 = vadd.f32 %v48, %v156
    %v158 = vpop.f32.mrb[0].mxu0
    %159 = vdwg.mxu0
    %160 = vmatprep.subr.mxu0 %v42
    %161 = vmatpush1.xpose.msra.mxu0 %v41
    %162 = vmatprep.subr.mxu0 0.0
    %163 = vmatpush1.xpose.msra.mxu0 0.0
    %164 = vmatprep.subr.mxu0 0.0
    %165 = vmatpush1.xpose.msra.mxu0 0.0
    %166 = vmatprep.subr.mxu0 0.0
    %167 = vmatpush1.xpose.msra.mxu0 0.0
    %168 = vmatprep.subr.mxu0 0.0
    %169 = vmatpush1.xpose.msra.mxu0 0.0
    %170 = vmatprep.subr.mxu0 0.0
    %171 = vmatpush1.xpose.msra.mxu0 0.0
    %172 = vmatprep.subr.mxu0 0.0
    %173 = vmatpush1.xpose.msra.mxu0 0.0
    %174 = vmatprep.subr.mxu0 0.0
    %175 = vmatpush1.xpose.msra.mxu0 0.0
    %176 = vmatprep.subr.mxu0 0.0
    %177 = vmatpush1.xpose.msra.mxu0 0.0
    %178 = vmatprep.subr.mxu0 0.0
    %179 = vmatpush1.xpose.msra.mxu0 0.0
    %180 = vmatprep.subr.mxu0 0.0
    %181 = vmatpush1.xpose.msra.mxu0 0.0
    %182 = vmatprep.subr.mxu0 0.0
    %183 = vmatpush1.xpose.msra.mxu0 0.0
    %184 = vmatprep.subr.mxu0 0.0
    %185 = vmatpush1.xpose.msra.mxu0 0.0
    %186 = vmatprep.subr.mxu0 0.0
    %187 = vmatpush1.xpose.msra.mxu0 0.0
    %188 = vmatprep.subr.mxu0 0.0
    %189 = vmatpush1.xpose.msra.mxu0 0.0
    %190 = vmatprep.subr.mxu0 0.0
    %191 = vmatpush1.xpose.msra.mxu0 0.0
    %192 = vmatprep.subr.mxu0 0.0
    %193 = vmatpush1.xpose.msra.mxu0 0.0
    %194 = vmatprep.subr.mxu0 0.0
    %195 = vmatpush1.xpose.msra.mxu0 0.0
    %196 = vmatprep.subr.mxu0 0.0
    %197 = vmatpush1.xpose.msra.mxu0 0.0
    %198 = vmatprep.subr.mxu0 0.0
    %199 = vmatpush1.xpose.msra.mxu0 0.0
    %200 = vmatprep.subr.mxu0 0.0
    %201 = vmatpush1.xpose.msra.mxu0 0.0
    %202 = vmatprep.subr.mxu0 0.0
    %203 = vmatpush1.xpose.msra.mxu0 0.0
    %204 = vmatprep.subr.mxu0 0.0
    %205 = vmatpush1.xpose.msra.mxu0 0.0
    %206 = vmatprep.subr.mxu0 0.0
    %207 = vmatpush1.xpose.msra.mxu0 0.0
    %208 = vmatprep.subr.mxu0 0.0
    %209 = vmatpush1.xpose.msra.mxu0 0.0
    %210 = vmatprep.subr.mxu0 0.0
    %211 = vmatpush1.xpose.msra.mxu0 0.0
    %212 = vmatprep.subr.mxu0 0.0
    %213 = vmatpush1.xpose.msra.mxu0 0.0
    %214 = vmatprep.subr.mxu0 0.0
    %215 = vmatpush1.xpose.msra.mxu0 0.0
    %216 = vmatprep.subr.mxu0 0.0
    %217 = vmatpush1.xpose.msra.mxu0 0.0
    %218 = vmatprep.subr.mxu0 0.0
    %219 = vmatpush1.xpose.msra.mxu0 0.0
    %220 = vmatprep.subr.mxu0 0.0
    %221 = vmatpush1.xpose.msra.mxu0 0.0
    %222 = vmatprep.subr.mxu0 0.0
    %223 = vmatpush1.xpose.msra.mxu0 0.0
    %224 = vmatprep.mubr.f32.mxu0 %v65
    %225 = vmatmul.mubr.f32.gmra.mrb[0].mxu0 %v61
    %v226 = vpop.f32.mrb[0].mxu0
    %v227 = vadd.f32 %v157, %v226
    %v228 = vpop.f32.mrb[0].mxu0
    %229 = vdwg.mxu0
    %230 = vmatprep.subr.mxu0 %v44
    %231 = vmatpush1.xpose.msra.mxu0 %v43
    %232 = vmatprep.subr.mxu0 0.0
    %233 = vmatpush1.xpose.msra.mxu0 0.0
    %234 = vmatprep.subr.mxu0 0.0
    %235 = vmatpush1.xpose.msra.mxu0 0.0
    %236 = vmatprep.subr.mxu0 0.0
    %237 = vmatpush1.xpose.msra.mxu0 0.0
    %238 = vmatprep.subr.mxu0 0.0
    %239 = vmatpush1.xpose.msra.mxu0 0.0
    %240 = vmatprep.subr.mxu0 0.0
    %241 = vmatpush1.xpose.msra.mxu0 0.0
    %242 = vmatprep.subr.mxu0 0.0
    %243 = vmatpush1.xpose.msra.mxu0 0.0
    %244 = vmatprep.subr.mxu0 0.0
    %245 = vmatpush1.xpose.msra.mxu0 0.0
    %246 = vmatprep.subr.mxu0 0.0
    %247 = vmatpush1.xpose.msra.mxu0 0.0
    %248 = vmatprep.subr.mxu0 0.0
    %249 = vmatpush1.xpose.msra.mxu0 0.0
    %250 = vmatprep.subr.mxu0 0.0
    %251 = vmatpush1.xpose.msra.mxu0 0.0
    %252 = vmatprep.subr.mxu0 0.0
    %253 = vmatpush1.xpose.msra.mxu0 0.0
    %254 = vmatprep.subr.mxu0 0.0
    %255 = vmatpush1.xpose.msra.mxu0 0.0
    %256 = vmatprep.subr.mxu0 0.0
    %257 = vmatpush1.xpose.msra.mxu0 0.0
    %258 = vmatprep.subr.mxu0 0.0
    %259 = vmatpush1.xpose.msra.mxu0 0.0
    %260 = vmatprep.subr.mxu0 0.0
    %261 = vmatpush1.xpose.msra.mxu0 0.0
    %262 = vmatprep.subr.mxu0 0.0
    %263 = vmatpush1.xpose.msra.mxu0 0.0
    %264 = vmatprep.subr.mxu0 0.0
    %265 = vmatpush1.xpose.msra.mxu0 0.0
    %266 = vmatprep.subr.mxu0 0.0
    %267 = vmatpush1.xpose.msra.mxu0 0.0
    %268 = vmatprep.subr.mxu0 0.0
    %269 = vmatpush1.xpose.msra.mxu0 0.0
    %270 = vmatprep.subr.mxu0 0.0
    %271 = vmatpush1.xpose.msra.mxu0 0.0
    %272 = vmatprep.subr.mxu0 0.0
    %273 = vmatpush1.xpose.msra.mxu0 0.0
    %274 = vmatprep.subr.mxu0 0.0
    %275 = vmatpush1.xpose.msra.mxu0 0.0
    %276 = vmatprep.subr.mxu0 0.0
    %277 = vmatpush1.xpose.msra.mxu0 0.0
    %278 = vmatprep.subr.mxu0 0.0
    %279 = vmatpush1.xpose.msra.mxu0 0.0
    %280 = vmatprep.subr.mxu0 0.0
    %281 = vmatpush1.xpose.msra.mxu0 0.0
    %282 = vmatprep.subr.mxu0 0.0
    %283 = vmatpush1.xpose.msra.mxu0 0.0
    %284 = vmatprep.subr.mxu0 0.0
    %285 = vmatpush1.xpose.msra.mxu0 0.0
    %286 = vmatprep.subr.mxu0 0.0
    %287 = vmatpush1.xpose.msra.mxu0 0.0
    %288 = vmatprep.subr.mxu0 0.0
    %289 = vmatpush1.xpose.msra.mxu0 0.0
    %290 = vmatprep.subr.mxu0 0.0
    %291 = vmatpush1.xpose.msra.mxu0 0.0
    %292 = vmatprep.subr.mxu0 0.0
    %293 = vmatpush1.xpose.msra.mxu0 0.0
    %294 = vmatprep.mubr.f32.mxu0 %v73
    %295 = vmatmul.mubr.f32.gmra.mrb[0].mxu0 %v69
    %v296 = vpop.f32.mrb[0].mxu0
    %v297 = vadd.f32 %v227, %v296
    %v298 = vpop.f32.mrb[0].mxu0
    %299 = vdwg.mxu0
    %300 = vmatprep.subr.mxu0 %v46
    %301 = vmatpush1.xpose.msra.mxu0 %v45
    %302 = vmatprep.subr.mxu0 0.0
    %303 = vmatpush1.xpose.msra.mxu0 0.0
    %304 = vmatprep.subr.mxu0 0.0
    %305 = vmatpush1.xpose.msra.mxu0 0.0
    %306 = vmatprep.subr.mxu0 0.0
    %307 = vmatpush1.xpose.msra.mxu0 0.0
    %308 = vmatprep.subr.mxu0 0.0
    %309 = vmatpush1.xpose.msra.mxu0 0.0
    %310 = vmatprep.subr.mxu0 0.0
    %311 = vmatpush1.xpose.msra.mxu0 0.0
    %312 = vmatprep.subr.mxu0 0.0
    %313 = vmatpush1.xpose.msra.mxu0 0.0
    %314 = vmatprep.subr.mxu0 0.0
    %315 = vmatpush1.xpose.msra.mxu0 0.0
    %316 = vmatprep.subr.mxu0 0.0
    %317 = vmatpush1.xpose.msra.mxu0 0.0
    %318 = vmatprep.subr.mxu0 0.0
    %319 = vmatpush1.xpose.msra.mxu0 0.0
    %320 = vmatprep.subr.mxu0 0.0
    %321 = vmatpush1.xpose.msra.mxu0 0.0
    %322 = vmatprep.subr.mxu0 0.0
    %323 = vmatpush1.xpose.msra.mxu0 0.0
    %324 = vmatprep.subr.mxu0 0.0
    %325 = vmatpush1.xpose.msra.mxu0 0.0
    %326 = vmatprep.subr.mxu0 0.0
    %327 = vmatpush1.xpose.msra.mxu0 0.0
    %328 = vmatprep.subr.mxu0 0.0
    %329 = vmatpush1.xpose.msra.mxu0 0.0
    %330 = vmatprep.subr.mxu0 0.0
    %331 = vmatpush1.xpose.msra.mxu0 0.0
    %332 = vmatprep.subr.mxu0 0.0
    %333 = vmatpush1.xpose.msra.mxu0 0.0
    %334 = vmatprep.subr.mxu0 0.0
    %335 = vmatpush1.xpose.msra.mxu0 0.0
    %336 = vmatprep.subr.mxu0 0.0
    %337 = vmatpush1.xpose.msra.mxu0 0.0
    %338 = vmatprep.subr.mxu0 0.0
    %339 = vmatpush1.xpose.msra.mxu0 0.0
    %340 = vmatprep.subr.mxu0 0.0
    %341 = vmatpush1.xpose.msra.mxu0 0.0
    %342 = vmatprep.subr.mxu0 0.0
    %343 = vmatpush1.xpose.msra.mxu0 0.0
    %344 = vmatprep.subr.mxu0 0.0
    %345 = vmatpush1.xpose.msra.mxu0 0.0
    %346 = vmatprep.subr.mxu0 0.0
    %347 = vmatpush1.xpose.msra.mxu0 0.0
    %348 = vmatprep.subr.mxu0 0.0
    %349 = vmatpush1.xpose.msra.mxu0 0.0
    %350 = vmatprep.subr.mxu0 0.0
    %351 = vmatpush1.xpose.msra.mxu0 0.0
    %352 = vmatprep.subr.mxu0 0.0
    %353 = vmatpush1.xpose.msra.mxu0 0.0
    %354 = vmatprep.subr.mxu0 0.0
    %355 = vmatpush1.xpose.msra.mxu0 0.0
    %356 = vmatprep.subr.mxu0 0.0
    %357 = vmatpush1.xpose.msra.mxu0 0.0
    %358 = vmatprep.subr.mxu0 0.0
    %359 = vmatpush1.xpose.msra.mxu0 0.0
    %360 = vmatprep.subr.mxu0 0.0
    %361 = vmatpush1.xpose.msra.mxu0 0.0
    %362 = vmatprep.subr.mxu0 0.0
    %363 = vmatpush1.xpose.msra.mxu0 0.0
    %364 = vmatprep.mubr.f32.mxu0 %v81
    %365 = vmatmul.mubr.f32.gmra.mrb[0].mxu0 %v77
    %v366 = vpop.f32.mrb[0].mxu0
    %v367 = vadd.f32 %v297, %v366
    %v368 = vpop.f32.mrb[0].mxu0
    %369 = vdwg.mxu0
    %vm370 = vcmask 57344
    %371 = vst.msk [vmem:[#allocation9] sm:$0x1] %vm370, %v367
    // Predicated region
    $region18: #{tpu_custom_call.1} parent=1 // pred_check
      _
    $region19: #{tpu_custom_call.1} parent=1 // pred_check_branch
      %373 = sbr.rel (0) target = $region21
    $region20: #{tpu_custom_call.1} parent=1 // pred_region
      %s375 = ssub.s32 16, 16
      %376 = vsyncadd [#allocation6], %s375
      %s378 = sshll.u32 [#allocation9], 4
      %s379 = int_to_ptr.vmem [resolvable:$true] %s378
      %381 = dma.vmem_to_hbm [thread:$0]  %s379, 16, %s3, [#allocation6]
    $region21: #{tpu_custom_call.1} parent=1 // pred_fallthru
      _
    // Predicated region
    $region22: #{tpu_custom_call.1} parent=1 // pred_check
      _
    $region23: #{tpu_custom_call.1} parent=1 // pred_check_branch
      %383 = sbr.rel (0) target = $region25
    $region24: #{tpu_custom_call.1} parent=1 // pred_region
      %384 = dma.done [#allocation6], 16
    $region25: #{tpu_custom_call.1} parent=1 // pred_fallthru
      _
    %385 = vsyncpa [#allocation5], 1
    %386 = vsyncpa [#allocation8], 1
    %387 = vsyncpa [#allocation6], 1

</llo_original>
